<compile_context>
chip_gen: v7x
topology: tpu7x:2x2x1
jax: 0.10.0
libtpu: 0.0.40
codegen_flags: <defaults>
</compile_context>

<pallas_src>
import functools

import jax
import jax.numpy as jnp
from jax.experimental import pallas as pl
from jax.experimental.pallas import tpu as pltpu


def _levdur_kernel(r_ref, out_ref, *, lpc_order, eps):
    # r_ref / out_ref blocks: (M+1, B_TILE); lag index on sublanes, batch on lanes.
    M = lpc_order

    def rrow(k):  # static row slice of the input tile -> (1, B) lane-dense vector
        return r_ref[k:k + 1, :].astype(jnp.float32)

    r0 = rrow(0)                                            # (1, B)

    if M == 0:
        out_ref[...] = jnp.sqrt(r0).astype(out_ref.dtype)
        return

    # --- Levinson-Durbin recursion (solves Toeplitz(r_hat) a = -r[1:]) -----
    # eps*I on the diagonal of R <=> r_hat[0] = r[0] + eps; r_hat[k>=1] = r[k].
    E = r0 + eps if eps != 0.0 else r0                      # prediction error, (1, B)
    a = []                                                  # a[j-1] == a_j, each (1, B)
    for m in range(1, M + 1):                               # static, fully unrolled
        acc = rrow(m)
        for j in range(1, m):
            acc = acc + a[j - 1] * rrow(m - j)
        k = -acc / E                                        # reflection coefficient
        a = [a[j - 1] + k * a[m - j - 1] for j in range(1, m)] + [k]
        E = E * (1.0 - k * k)

    # --- gain: K = sqrt(sum(r1 * a) + r0) (original r0, no eps) ------------
    s = r0
    for m in range(1, M + 1):
        s = s + rrow(m) * a[m - 1]
    K = jnp.sqrt(s)                                         # (1, B)

    out = jnp.concatenate([K] + a, axis=0)                  # (M+1, B)
    out_ref[...] = out.astype(out_ref.dtype)                # single dense store


def levinson_durbin(r, lpc_order, eps=0.0, block_b=512):
    """r: (..., M+1) autocorrelation -> (..., M+1) [gain, LPC coefficients]."""
    r = jnp.asarray(r)
    orig_shape = r.shape
    M1 = orig_shape[-1]
    assert M1 == lpc_order + 1
    r2 = r.reshape(-1, M1)
    B = r2.shape[0]

    # Lane tile: multiple of 128, no larger than needed; aim for >=2 grid steps
    # (v7x megacore) when there is enough work.
    block_b = max(128, (int(block_b) // 128) * 128)
    b_pad128 = -(-B // 128) * 128
    block_b = min(block_b, b_pad128)
    if b_pad128 // block_b < 2 and b_pad128 >= 256:
        block_b = max(128, (b_pad128 // 2 // 128) * 128)
    grid = -(-b_pad128 // block_b)
    B_pad = grid * block_b

    # Pad batch with benign autocorrelations [1, 0, ..., 0] (a=0, K=1, no NaNs).
    if B_pad != B:
        pad = jnp.zeros((B_pad - B, M1), r2.dtype).at[:, 0].set(1.0)
        r2 = jnp.concatenate([r2, pad], axis=0)

    rt = r2.T                                               # (M+1, B_pad): batch on lanes

    kernel = functools.partial(_levdur_kernel, lpc_order=lpc_order, eps=float(eps))
    out_t = pl.pallas_call(
        kernel,
        out_shape=jax.ShapeDtypeStruct((M1, B_pad), r.dtype),
        grid=(grid,),
        in_specs=[pl.BlockSpec((M1, block_b), lambda i: (0, i))],
        out_specs=pl.BlockSpec((M1, block_b), lambda i: (0, i)),
        compiler_params=pltpu.CompilerParams(dimension_semantics=("parallel",)),
    )(rt)

    return out_t.T[:B].reshape(orig_shape)


if __name__ == "__main__":
    key = jax.random.PRNGKey(0)
    B, N, M = 8, 32, 7  # batch, signal length, LPC order (M+1 = 8 lags)

    # Build a valid autocorrelation (guarantees SPD Toeplitz and a real gain).
    x = jax.random.normal(key, (B, N), dtype=jnp.float32)
    r = jnp.stack(
        [jnp.sum(x[:, : N - k] * x[:, k:], axis=-1) for k in range(M + 1)], axis=-1
    )  # (B, M+1)

    out = levinson_durbin(r, lpc_order=M, eps=0.0)
    out = jax.block_until_ready(out)

    # Pure-JAX reference mirroring the PyTorch module (matrix-inversion based).
    idx = jnp.abs(jnp.arange(M)[:, None] - jnp.arange(M)[None, :])
    Rtoep = r[:, :-1][:, idx]                               # (B, M, M)
    a_ref = jnp.linalg.solve(Rtoep, -r[:, 1:, None])[..., 0]
    K_ref = jnp.sqrt(jnp.sum(r[:, 1:] * a_ref, axis=-1, keepdims=True) + r[:, 0:1])
    ref = jnp.concatenate([K_ref, a_ref], axis=-1)

    assert out.shape == (B, M + 1)
    assert jnp.allclose(out, ref, rtol=1e-3, atol=1e-3), (out, ref)
    print("KERNEL_OK")
</pallas_src>

<mosaic_0001>
module attributes {stable_mosaic.version = 11 : i64} {
  func.func @_levdur_kernel(%arg0: i32, %arg1: memref<8x128xf32, #tpu.memory_space<vmem>>, %arg2: memref<8x128xf32, #tpu.memory_space<vmem>>) attributes {dimension_semantics = [#tpu.dimension_semantics<parallel>], iteration_bounds = array<i64: 1>, scalar_prefetch = 0 : i64, scratch_operands = 0 : i64, tpu.core_type = #tpu.core_type<tc>, window_params = [{transform_indices = @transform_0, window_bounds = array<i64: 8, 128>}, {transform_indices = @transform_1, window_bounds = array<i64: 8, 128>}]} {
    %c0 = arith.constant 0 : index
    %c0_0 = arith.constant 0 : index
    %0 = vector.load %arg1[%c0, %c0_0] : memref<8x128xf32, #tpu.memory_space<vmem>>, vector<1x128xf32>
    %c1 = arith.constant 1 : index
    %c0_1 = arith.constant 0 : index
    %1 = vector.load %arg1[%c1, %c0_1] : memref<8x128xf32, #tpu.memory_space<vmem>>, vector<1x128xf32>
    %cst = arith.constant 0.000000e+00 : f32
    %2 = vector.broadcast %cst : f32 to vector<1x128xf32>
    %3 = arith.subf %2, %1 : vector<1x128xf32>
    %4 = arith.divf %3, %0 : vector<1x128xf32>
    %5 = arith.mulf %4, %4 : vector<1x128xf32>
    %cst_2 = arith.constant 1.000000e+00 : f32
    %6 = vector.broadcast %cst_2 : f32 to vector<1x128xf32>
    %7 = arith.subf %6, %5 : vector<1x128xf32>
    %8 = arith.mulf %0, %7 : vector<1x128xf32>
    %c2 = arith.constant 2 : index
    %c0_3 = arith.constant 0 : index
    %9 = vector.load %arg1[%c2, %c0_3] : memref<8x128xf32, #tpu.memory_space<vmem>>, vector<1x128xf32>
    %c1_4 = arith.constant 1 : index
    %c0_5 = arith.constant 0 : index
    %10 = vector.load %arg1[%c1_4, %c0_5] : memref<8x128xf32, #tpu.memory_space<vmem>>, vector<1x128xf32>
    %11 = arith.mulf %4, %10 : vector<1x128xf32>
    %12 = arith.addf %9, %11 : vector<1x128xf32>
    %cst_6 = arith.constant 0.000000e+00 : f32
    %13 = vector.broadcast %cst_6 : f32 to vector<1x128xf32>
    %14 = arith.subf %13, %12 : vector<1x128xf32>
    %15 = arith.divf %14, %8 : vector<1x128xf32>
    %16 = arith.mulf %15, %4 : vector<1x128xf32>
    %17 = arith.addf %4, %16 : vector<1x128xf32>
    %18 = arith.mulf %15, %15 : vector<1x128xf32>
    %cst_7 = arith.constant 1.000000e+00 : f32
    %19 = vector.broadcast %cst_7 : f32 to vector<1x128xf32>
    %20 = arith.subf %19, %18 : vector<1x128xf32>
    %21 = arith.mulf %8, %20 : vector<1x128xf32>
    %c3 = arith.constant 3 : index
    %c0_8 = arith.constant 0 : index
    %22 = vector.load %arg1[%c3, %c0_8] : memref<8x128xf32, #tpu.memory_space<vmem>>, vector<1x128xf32>
    %c2_9 = arith.constant 2 : index
    %c0_10 = arith.constant 0 : index
    %23 = vector.load %arg1[%c2_9, %c0_10] : memref<8x128xf32, #tpu.memory_space<vmem>>, vector<1x128xf32>
    %24 = arith.mulf %17, %23 : vector<1x128xf32>
    %25 = arith.addf %22, %24 : vector<1x128xf32>
    %c1_11 = arith.constant 1 : index
    %c0_12 = arith.constant 0 : index
    %26 = vector.load %arg1[%c1_11, %c0_12] : memref<8x128xf32, #tpu.memory_space<vmem>>, vector<1x128xf32>
    %27 = arith.mulf %15, %26 : vector<1x128xf32>
    %28 = arith.addf %25, %27 : vector<1x128xf32>
    %cst_13 = arith.constant 0.000000e+00 : f32
    %29 = vector.broadcast %cst_13 : f32 to vector<1x128xf32>
    %30 = arith.subf %29, %28 : vector<1x128xf32>
    %31 = arith.divf %30, %21 : vector<1x128xf32>
    %32 = arith.mulf %31, %15 : vector<1x128xf32>
    %33 = arith.addf %17, %32 : vector<1x128xf32>
    %34 = arith.mulf %31, %17 : vector<1x128xf32>
    %35 = arith.addf %15, %34 : vector<1x128xf32>
    %36 = arith.mulf %31, %31 : vector<1x128xf32>
    %cst_14 = arith.constant 1.000000e+00 : f32
    %37 = vector.broadcast %cst_14 : f32 to vector<1x128xf32>
    %38 = arith.subf %37, %36 : vector<1x128xf32>
    %39 = arith.mulf %21, %38 : vector<1x128xf32>
    %c4 = arith.constant 4 : index
    %c0_15 = arith.constant 0 : index
    %40 = vector.load %arg1[%c4, %c0_15] : memref<8x128xf32, #tpu.memory_space<vmem>>, vector<1x128xf32>
    %c3_16 = arith.constant 3 : index
    %c0_17 = arith.constant 0 : index
    %41 = vector.load %arg1[%c3_16, %c0_17] : memref<8x128xf32, #tpu.memory_space<vmem>>, vector<1x128xf32>
    %42 = arith.mulf %33, %41 : vector<1x128xf32>
    %43 = arith.addf %40, %42 : vector<1x128xf32>
    %c2_18 = arith.constant 2 : index
    %c0_19 = arith.constant 0 : index
    %44 = vector.load %arg1[%c2_18, %c0_19] : memref<8x128xf32, #tpu.memory_space<vmem>>, vector<1x128xf32>
    %45 = arith.mulf %35, %44 : vector<1x128xf32>
    %46 = arith.addf %43, %45 : vector<1x128xf32>
    %c1_20 = arith.constant 1 : index
    %c0_21 = arith.constant 0 : index
    %47 = vector.load %arg1[%c1_20, %c0_21] : memref<8x128xf32, #tpu.memory_space<vmem>>, vector<1x128xf32>
    %48 = arith.mulf %31, %47 : vector<1x128xf32>
    %49 = arith.addf %46, %48 : vector<1x128xf32>
    %cst_22 = arith.constant 0.000000e+00 : f32
    %50 = vector.broadcast %cst_22 : f32 to vector<1x128xf32>
    %51 = arith.subf %50, %49 : vector<1x128xf32>
    %52 = arith.divf %51, %39 : vector<1x128xf32>
    %53 = arith.mulf %52, %31 : vector<1x128xf32>
    %54 = arith.addf %33, %53 : vector<1x128xf32>
    %55 = arith.mulf %52, %35 : vector<1x128xf32>
    %56 = arith.addf %35, %55 : vector<1x128xf32>
    %57 = arith.mulf %52, %33 : vector<1x128xf32>
    %58 = arith.addf %31, %57 : vector<1x128xf32>
    %59 = arith.mulf %52, %52 : vector<1x128xf32>
    %cst_23 = arith.constant 1.000000e+00 : f32
    %60 = vector.broadcast %cst_23 : f32 to vector<1x128xf32>
    %61 = arith.subf %60, %59 : vector<1x128xf32>
    %62 = arith.mulf %39, %61 : vector<1x128xf32>
    %c5 = arith.constant 5 : index
    %c0_24 = arith.constant 0 : index
    %63 = vector.load %arg1[%c5, %c0_24] : memref<8x128xf32, #tpu.memory_space<vmem>>, vector<1x128xf32>
    %c4_25 = arith.constant 4 : index
    %c0_26 = arith.constant 0 : index
    %64 = vector.load %arg1[%c4_25, %c0_26] : memref<8x128xf32, #tpu.memory_space<vmem>>, vector<1x128xf32>
    %65 = arith.mulf %54, %64 : vector<1x128xf32>
    %66 = arith.addf %63, %65 : vector<1x128xf32>
    %c3_27 = arith.constant 3 : index
    %c0_28 = arith.constant 0 : index
    %67 = vector.load %arg1[%c3_27, %c0_28] : memref<8x128xf32, #tpu.memory_space<vmem>>, vector<1x128xf32>
    %68 = arith.mulf %56, %67 : vector<1x128xf32>
    %69 = arith.addf %66, %68 : vector<1x128xf32>
    %c2_29 = arith.constant 2 : index
    %c0_30 = arith.constant 0 : index
    %70 = vector.load %arg1[%c2_29, %c0_30] : memref<8x128xf32, #tpu.memory_space<vmem>>, vector<1x128xf32>
    %71 = arith.mulf %58, %70 : vector<1x128xf32>
    %72 = arith.addf %69, %71 : vector<1x128xf32>
    %c1_31 = arith.constant 1 : index
    %c0_32 = arith.constant 0 : index
    %73 = vector.load %arg1[%c1_31, %c0_32] : memref<8x128xf32, #tpu.memory_space<vmem>>, vector<1x128xf32>
    %74 = arith.mulf %52, %73 : vector<1x128xf32>
    %75 = arith.addf %72, %74 : vector<1x128xf32>
    %cst_33 = arith.constant 0.000000e+00 : f32
    %76 = vector.broadcast %cst_33 : f32 to vector<1x128xf32>
    %77 = arith.subf %76, %75 : vector<1x128xf32>
    %78 = arith.divf %77, %62 : vector<1x128xf32>
    %79 = arith.mulf %78, %52 : vector<1x128xf32>
    %80 = arith.addf %54, %79 : vector<1x128xf32>
    %81 = arith.mulf %78, %58 : vector<1x128xf32>
    %82 = arith.addf %56, %81 : vector<1x128xf32>
    %83 = arith.mulf %78, %56 : vector<1x128xf32>
    %84 = arith.addf %58, %83 : vector<1x128xf32>
    %85 = arith.mulf %78, %54 : vector<1x128xf32>
    %86 = arith.addf %52, %85 : vector<1x128xf32>
    %87 = arith.mulf %78, %78 : vector<1x128xf32>
    %cst_34 = arith.constant 1.000000e+00 : f32
    %88 = vector.broadcast %cst_34 : f32 to vector<1x128xf32>
    %89 = arith.subf %88, %87 : vector<1x128xf32>
    %90 = arith.mulf %62, %89 : vector<1x128xf32>
    %c6 = arith.constant 6 : index
    %c0_35 = arith.constant 0 : index
    %91 = vector.load %arg1[%c6, %c0_35] : memref<8x128xf32, #tpu.memory_space<vmem>>, vector<1x128xf32>
    %c5_36 = arith.constant 5 : index
    %c0_37 = arith.constant 0 : index
    %92 = vector.load %arg1[%c5_36, %c0_37] : memref<8x128xf32, #tpu.memory_space<vmem>>, vector<1x128xf32>
    %93 = arith.mulf %80, %92 : vector<1x128xf32>
    %94 = arith.addf %91, %93 : vector<1x128xf32>
    %c4_38 = arith.constant 4 : index
    %c0_39 = arith.constant 0 : index
    %95 = vector.load %arg1[%c4_38, %c0_39] : memref<8x128xf32, #tpu.memory_space<vmem>>, vector<1x128xf32>
    %96 = arith.mulf %82, %95 : vector<1x128xf32>
    %97 = arith.addf %94, %96 : vector<1x128xf32>
    %c3_40 = arith.constant 3 : index
    %c0_41 = arith.constant 0 : index
    %98 = vector.load %arg1[%c3_40, %c0_41] : memref<8x128xf32, #tpu.memory_space<vmem>>, vector<1x128xf32>
    %99 = arith.mulf %84, %98 : vector<1x128xf32>
    %100 = arith.addf %97, %99 : vector<1x128xf32>
    %c2_42 = arith.constant 2 : index
    %c0_43 = arith.constant 0 : index
    %101 = vector.load %arg1[%c2_42, %c0_43] : memref<8x128xf32, #tpu.memory_space<vmem>>, vector<1x128xf32>
    %102 = arith.mulf %86, %101 : vector<1x128xf32>
    %103 = arith.addf %100, %102 : vector<1x128xf32>
    %c1_44 = arith.constant 1 : index
    %c0_45 = arith.constant 0 : index
    %104 = vector.load %arg1[%c1_44, %c0_45] : memref<8x128xf32, #tpu.memory_space<vmem>>, vector<1x128xf32>
    %105 = arith.mulf %78, %104 : vector<1x128xf32>
    %106 = arith.addf %103, %105 : vector<1x128xf32>
    %cst_46 = arith.constant 0.000000e+00 : f32
    %107 = vector.broadcast %cst_46 : f32 to vector<1x128xf32>
    %108 = arith.subf %107, %106 : vector<1x128xf32>
    %109 = arith.divf %108, %90 : vector<1x128xf32>
    %110 = arith.mulf %109, %78 : vector<1x128xf32>
    %111 = arith.addf %80, %110 : vector<1x128xf32>
    %112 = arith.mulf %109, %86 : vector<1x128xf32>
    %113 = arith.addf %82, %112 : vector<1x128xf32>
    %114 = arith.mulf %109, %84 : vector<1x128xf32>
    %115 = arith.addf %84, %114 : vector<1x128xf32>
    %116 = arith.mulf %109, %82 : vector<1x128xf32>
    %117 = arith.addf %86, %116 : vector<1x128xf32>
    %118 = arith.mulf %109, %80 : vector<1x128xf32>
    %119 = arith.addf %78, %118 : vector<1x128xf32>
    %120 = arith.mulf %109, %109 : vector<1x128xf32>
    %cst_47 = arith.constant 1.000000e+00 : f32
    %121 = vector.broadcast %cst_47 : f32 to vector<1x128xf32>
    %122 = arith.subf %121, %120 : vector<1x128xf32>
    %123 = arith.mulf %90, %122 : vector<1x128xf32>
    %c7 = arith.constant 7 : index
    %c0_48 = arith.constant 0 : index
    %124 = vector.load %arg1[%c7, %c0_48] : memref<8x128xf32, #tpu.memory_space<vmem>>, vector<1x128xf32>
    %c6_49 = arith.constant 6 : index
    %c0_50 = arith.constant 0 : index
    %125 = vector.load %arg1[%c6_49, %c0_50] : memref<8x128xf32, #tpu.memory_space<vmem>>, vector<1x128xf32>
    %126 = arith.mulf %111, %125 : vector<1x128xf32>
    %127 = arith.addf %124, %126 : vector<1x128xf32>
    %c5_51 = arith.constant 5 : index
    %c0_52 = arith.constant 0 : index
    %128 = vector.load %arg1[%c5_51, %c0_52] : memref<8x128xf32, #tpu.memory_space<vmem>>, vector<1x128xf32>
    %129 = arith.mulf %113, %128 : vector<1x128xf32>
    %130 = arith.addf %127, %129 : vector<1x128xf32>
    %c4_53 = arith.constant 4 : index
    %c0_54 = arith.constant 0 : index
    %131 = vector.load %arg1[%c4_53, %c0_54] : memref<8x128xf32, #tpu.memory_space<vmem>>, vector<1x128xf32>
    %132 = arith.mulf %115, %131 : vector<1x128xf32>
    %133 = arith.addf %130, %132 : vector<1x128xf32>
    %c3_55 = arith.constant 3 : index
    %c0_56 = arith.constant 0 : index
    %134 = vector.load %arg1[%c3_55, %c0_56] : memref<8x128xf32, #tpu.memory_space<vmem>>, vector<1x128xf32>
    %135 = arith.mulf %117, %134 : vector<1x128xf32>
    %136 = arith.addf %133, %135 : vector<1x128xf32>
    %c2_57 = arith.constant 2 : index
    %c0_58 = arith.constant 0 : index
    %137 = vector.load %arg1[%c2_57, %c0_58] : memref<8x128xf32, #tpu.memory_space<vmem>>, vector<1x128xf32>
    %138 = arith.mulf %119, %137 : vector<1x128xf32>
    %139 = arith.addf %136, %138 : vector<1x128xf32>
    %c1_59 = arith.constant 1 : index
    %c0_60 = arith.constant 0 : index
    %140 = vector.load %arg1[%c1_59, %c0_60] : memref<8x128xf32, #tpu.memory_space<vmem>>, vector<1x128xf32>
    %141 = arith.mulf %109, %140 : vector<1x128xf32>
    %142 = arith.addf %139, %141 : vector<1x128xf32>
    %cst_61 = arith.constant 0.000000e+00 : f32
    %143 = vector.broadcast %cst_61 : f32 to vector<1x128xf32>
    %144 = arith.subf %143, %142 : vector<1x128xf32>
    %145 = arith.divf %144, %123 : vector<1x128xf32>
    %146 = arith.mulf %145, %109 : vector<1x128xf32>
    %147 = arith.addf %111, %146 : vector<1x128xf32>
    %148 = arith.mulf %145, %119 : vector<1x128xf32>
    %149 = arith.addf %113, %148 : vector<1x128xf32>
    %150 = arith.mulf %145, %117 : vector<1x128xf32>
    %151 = arith.addf %115, %150 : vector<1x128xf32>
    %152 = arith.mulf %145, %115 : vector<1x128xf32>
    %153 = arith.addf %117, %152 : vector<1x128xf32>
    %154 = arith.mulf %145, %113 : vector<1x128xf32>
    %155 = arith.addf %119, %154 : vector<1x128xf32>
    %156 = arith.mulf %145, %111 : vector<1x128xf32>
    %157 = arith.addf %109, %156 : vector<1x128xf32>
    %c1_62 = arith.constant 1 : index
    %c0_63 = arith.constant 0 : index
    %158 = vector.load %arg1[%c1_62, %c0_63] : memref<8x128xf32, #tpu.memory_space<vmem>>, vector<1x128xf32>
    %159 = arith.mulf %158, %147 : vector<1x128xf32>
    %160 = arith.addf %0, %159 : vector<1x128xf32>
    %c2_64 = arith.constant 2 : index
    %c0_65 = arith.constant 0 : index
    %161 = vector.load %arg1[%c2_64, %c0_65] : memref<8x128xf32, #tpu.memory_space<vmem>>, vector<1x128xf32>
    %162 = arith.mulf %161, %149 : vector<1x128xf32>
    %163 = arith.addf %160, %162 : vector<1x128xf32>
    %c3_66 = arith.constant 3 : index
    %c0_67 = arith.constant 0 : index
    %164 = vector.load %arg1[%c3_66, %c0_67] : memref<8x128xf32, #tpu.memory_space<vmem>>, vector<1x128xf32>
    %165 = arith.mulf %164, %151 : vector<1x128xf32>
    %166 = arith.addf %163, %165 : vector<1x128xf32>
    %c4_68 = arith.constant 4 : index
    %c0_69 = arith.constant 0 : index
    %167 = vector.load %arg1[%c4_68, %c0_69] : memref<8x128xf32, #tpu.memory_space<vmem>>, vector<1x128xf32>
    %168 = arith.mulf %167, %153 : vector<1x128xf32>
    %169 = arith.addf %166, %168 : vector<1x128xf32>
    %c5_70 = arith.constant 5 : index
    %c0_71 = arith.constant 0 : index
    %170 = vector.load %arg1[%c5_70, %c0_71] : memref<8x128xf32, #tpu.memory_space<vmem>>, vector<1x128xf32>
    %171 = arith.mulf %170, %155 : vector<1x128xf32>
    %172 = arith.addf %169, %171 : vector<1x128xf32>
    %c6_72 = arith.constant 6 : index
    %c0_73 = arith.constant 0 : index
    %173 = vector.load %arg1[%c6_72, %c0_73] : memref<8x128xf32, #tpu.memory_space<vmem>>, vector<1x128xf32>
    %174 = arith.mulf %173, %157 : vector<1x128xf32>
    %175 = arith.addf %172, %174 : vector<1x128xf32>
    %c7_74 = arith.constant 7 : index
    %c0_75 = arith.constant 0 : index
    %176 = vector.load %arg1[%c7_74, %c0_75] : memref<8x128xf32, #tpu.memory_space<vmem>>, vector<1x128xf32>
    %177 = arith.mulf %176, %145 : vector<1x128xf32>
    %178 = arith.addf %175, %177 : vector<1x128xf32>
    %179 = math.sqrt %178 : vector<1x128xf32>
    %180 = tpu.concatenate %179, %147, %149, %151, %153, %155, %157, %145 in 0 : vector<1x128xf32>, vector<1x128xf32>, vector<1x128xf32>, vector<1x128xf32>, vector<1x128xf32>, vector<1x128xf32>, vector<1x128xf32>, vector<1x128xf32> -> vector<8x128xf32>
    %c0_76 = arith.constant 0 : index
    %c0_77 = arith.constant 0 : index
    %181 = vector.load %arg2[%c0_76, %c0_77] : memref<8x128xf32, #tpu.memory_space<vmem>>, vector<8x128xf32>
    tpu.vector_store %arg2[%c0_76, %c0_77], %180 {strides = array<i32>} : memref<8x128xf32, #tpu.memory_space<vmem>>, vector<8x128xf32>,
    return
  }
  func.func @transform_0(%arg0: i32) -> (i32, i32) {
    %c0_i32 = arith.constant 0 : i32
    %c0_i32_0 = arith.constant 0 : i32
    return %c0_i32, %arg0 : i32, i32
  }
  func.func @transform_1(%arg0: i32) -> (i32, i32) {
    %c0_i32 = arith.constant 0 : i32
    %c0_i32_0 = arith.constant 0 : i32
    return %c0_i32, %arg0 : i32, i32
  }
}

</mosaic_0001>

<llo_original>
// kernel: tpu_custom_call.1
$region0: #{tpu_custom_call.1}
  #allocation0 [shape = 'u32[]', space=smem, size = 0x4, offset = 0x4, fixed_abs, tag = 'smem constant byte address 0x4 - core index']
  #allocation1 [shape = 'u32[144,128]{1,0:T(1,128)}', space=vmem, size = 0x12000, scoped, tag = 'internal scratch']
  %s0 = inlined_call_operand.hbm [shape: f32[8,128], index: 0, kind: input, shape index: {}]
  %s1 = inlined_call_operand.hbm [shape: f32[8,128], index: 1, kind: output, shape index: {}]
  %s2 = sld [smem:[#allocation0]]
  $region18: #{tpu_custom_call.1} parent=0
    _
  %s4 = ssub.s32 1, %s2
  %s5 = scalar_select 0, %s4, %s2
  $region1: #{tpu_custom_call.1} parent=0
    #allocation2 [shape = 'u8[4096]{0}', space=vmem, size = 0x1000, scoped, tag = 'input window, operand 0, single buffered']
    #allocation3 [shape = 's32[1]{0}', space=sflag, size = 0x4, scoped, tag = 'scoped memory for tpu_custom_call.1']
    #allocation4 [shape = 's32[1]{0}', space=sflag, size = 0x4, scoped, tag = 'scoped memory for tpu_custom_call.1']
    #allocation5 [shape = 'u8[4096]{0}', space=vmem, size = 0x1000, scoped, tag = 'output window, operand 0, single buffered']
    %6 = vsyncpa [#allocation3], 0
    %7 = vsyncpa [#allocation4], 0
    // Predicated region
    $region2: #{tpu_custom_call.1} parent=1 // pred_check
      _
    $region3: #{tpu_custom_call.1} parent=1 // pred_check_branch
      %9 = sbr.rel (0) target = $region5
    $region4: #{tpu_custom_call.1} parent=1 // pred_region
      %s11 = ssub.s32 128, 128
      %12 = vsyncadd [#allocation3], %s11
      %s14 = sshll.u32 [#allocation2], 4
      %s15 = int_to_ptr.vmem [resolvable:$true] %s14
      %17 = dma.hbm_to_vmem [thread:$0]  %s0, 128, %s15, [#allocation3]
    $region5: #{tpu_custom_call.1} parent=1 // pred_fallthru
      _
    // Predicated region
    $region6: #{tpu_custom_call.1} parent=1 // pred_check
      _
    $region7: #{tpu_custom_call.1} parent=1 // pred_check_branch
      %19 = sbr.rel (0) target = $region9
    $region8: #{tpu_custom_call.1} parent=1 // pred_region
      %20 = dma.done [#allocation3], 128
    $region9: #{tpu_custom_call.1} parent=1 // pred_fallthru
      _
    %v21 = vld [vmem:[#allocation2] sm:$0x1]
    %v22 = vld [vmem:[#allocation2 + $0x1] sm:$0x1]
    %v23 = vsub.f32 0.0, %v22
    %v24 = vrcp.pop %v21
    %v25 = vmul.f32 %v23, %v24
    %v26 = vmul.f32 %v25, %v25
    %v27 = vsub.f32 1.0, %v26
    %v28 = vmul.f32 %v21, %v27
    %v29 = vld [vmem:[#allocation2 + $0x2] sm:$0x1]
    %v30 = vmul.f32 %v25, %v22
    %v31 = vadd.f32 %v29, %v30
    %v32 = vsub.f32 0.0, %v31
    %v33 = vrcp.pop %v28
    %v34 = vmul.f32 %v32, %v33
    %v35 = vmul.f32 %v34, %v25
    %v36 = vadd.f32 %v25, %v35
    %v37 = vmul.f32 %v34, %v34
    %v38 = vsub.f32 1.0, %v37
    %v39 = vmul.f32 %v28, %v38
    %v40 = vld [vmem:[#allocation2 + $0x3] sm:$0x1]
    %v41 = vmul.f32 %v36, %v29
    %v42 = vadd.f32 %v40, %v41
    %v43 = vmul.f32 %v34, %v22
    %v44 = vadd.f32 %v42, %v43
    %v45 = vsub.f32 0.0, %v44
    %v46 = vrcp.pop %v39
    %v47 = vmul.f32 %v45, %v46
    %v48 = vmul.f32 %v47, %v34
    %v49 = vadd.f32 %v36, %v48
    %v50 = vmul.f32 %v47, %v36
    %v51 = vadd.f32 %v34, %v50
    %v52 = vmul.f32 %v47, %v47
    %v53 = vsub.f32 1.0, %v52
    %v54 = vmul.f32 %v39, %v53
    %v55 = vld [vmem:[#allocation2 + $0x4] sm:$0x1]
    %v56 = vmul.f32 %v49, %v40
    %v57 = vadd.f32 %v55, %v56
    %v58 = vmul.f32 %v51, %v29
    %v59 = vadd.f32 %v57, %v58
    %v60 = vmul.f32 %v47, %v22
    %v61 = vadd.f32 %v59, %v60
    %v62 = vsub.f32 0.0, %v61
    %v63 = vrcp.pop %v54
    %v64 = vmul.f32 %v62, %v63
    %v65 = vmul.f32 %v64, %v47
    %v66 = vadd.f32 %v49, %v65
    %v67 = vmul.f32 %v64, %v51
    %v68 = vadd.f32 %v51, %v67
    %v69 = vmul.f32 %v64, %v49
    %v70 = vadd.f32 %v47, %v69
    %v71 = vmul.f32 %v64, %v64
    %v72 = vsub.f32 1.0, %v71
    %v73 = vmul.f32 %v54, %v72
    %v74 = vld [vmem:[#allocation2 + $0x5] sm:$0x1]
    %v75 = vmul.f32 %v66, %v55
    %v76 = vadd.f32 %v74, %v75
    %v77 = vmul.f32 %v68, %v40
    %v78 = vadd.f32 %v76, %v77
    %v79 = vmul.f32 %v70, %v29
    %v80 = vadd.f32 %v78, %v79
    %v81 = vmul.f32 %v64, %v22
    %v82 = vadd.f32 %v80, %v81
    %v83 = vsub.f32 0.0, %v82
    %v84 = vrcp.pop %v73
    %v85 = vmul.f32 %v83, %v84
    %v86 = vmul.f32 %v85, %v64
    %v87 = vadd.f32 %v66, %v86
    %v88 = vmul.f32 %v85, %v70
    %v89 = vadd.f32 %v68, %v88
    %v90 = vmul.f32 %v85, %v68
    %v91 = vadd.f32 %v70, %v90
    %v92 = vmul.f32 %v85, %v66
    %v93 = vadd.f32 %v64, %v92
    %v94 = vmul.f32 %v85, %v85
    %v95 = vsub.f32 1.0, %v94
    %v96 = vmul.f32 %v73, %v95
    %v97 = vld [vmem:[#allocation2 + $0x6] sm:$0x1]
    %v98 = vmul.f32 %v87, %v74
    %v99 = vadd.f32 %v97, %v98
    %v100 = vmul.f32 %v89, %v55
    %v101 = vadd.f32 %v99, %v100
    %v102 = vmul.f32 %v91, %v40
    %v103 = vadd.f32 %v101, %v102
    %v104 = vmul.f32 %v93, %v29
    %v105 = vadd.f32 %v103, %v104
    %v106 = vmul.f32 %v85, %v22
    %v107 = vadd.f32 %v105, %v106
    %v108 = vsub.f32 0.0, %v107
    %v109 = vrcp.pop %v96
    %v110 = vmul.f32 %v108, %v109
    %v111 = vmul.f32 %v110, %v85
    %v112 = vadd.f32 %v87, %v111
    %v113 = vmul.f32 %v110, %v93
    %v114 = vadd.f32 %v89, %v113
    %v115 = vmul.f32 %v110, %v91
    %v116 = vadd.f32 %v91, %v115
    %v117 = vmul.f32 %v110, %v89
    %v118 = vadd.f32 %v93, %v117
    %v119 = vmul.f32 %v110, %v87
    %v120 = vadd.f32 %v85, %v119
    %v121 = vmul.f32 %v110, %v110
    %v122 = vsub.f32 1.0, %v121
    %v123 = vmul.f32 %v96, %v122
    %v124 = vld [vmem:[#allocation2 + $0x7] sm:$0x1]
    %v125 = vmul.f32 %v112, %v97
    %v126 = vadd.f32 %v124, %v125
    %v127 = vmul.f32 %v114, %v74
    %v128 = vadd.f32 %v126, %v127
    %v129 = vmul.f32 %v116, %v55
    %v130 = vadd.f32 %v128, %v129
    %v131 = vmul.f32 %v118, %v40
    %v132 = vadd.f32 %v130, %v131
    %v133 = vmul.f32 %v120, %v29
    %v134 = vadd.f32 %v132, %v133
    %v135 = vmul.f32 %v110, %v22
    %v136 = vadd.f32 %v134, %v135
    %v137 = vsub.f32 0.0, %v136
    %v138 = vrcp.pop %v123
    %v139 = vmul.f32 %v137, %v138
    %v140 = vmul.f32 %v139, %v110
    %v141 = vadd.f32 %v112, %v140
    %v142 = vmul.f32 %v139, %v120
    %v143 = vadd.f32 %v114, %v142
    %v144 = vmul.f32 %v139, %v118
    %v145 = vadd.f32 %v116, %v144
    %v146 = vmul.f32 %v139, %v116
    %v147 = vadd.f32 %v118, %v146
    %v148 = vmul.f32 %v139, %v114
    %v149 = vadd.f32 %v120, %v148
    %v150 = vmul.f32 %v139, %v112
    %v151 = vadd.f32 %v110, %v150
    %v152 = vmul.f32 %v22, %v141
    %v153 = vadd.f32 %v21, %v152
    %v154 = vmul.f32 %v29, %v143
    %v155 = vadd.f32 %v153, %v154
    %v156 = vmul.f32 %v40, %v145
    %v157 = vadd.f32 %v155, %v156
    %v158 = vmul.f32 %v55, %v147
    %v159 = vadd.f32 %v157, %v158
    %v160 = vmul.f32 %v74, %v149
    %v161 = vadd.f32 %v159, %v160
    %v162 = vmul.f32 %v97, %v151
    %v163 = vadd.f32 %v161, %v162
    %v164 = vmul.f32 %v124, %v139
    %v165 = vadd.f32 %v163, %v164
    %v166 = vrsqrt.pop %v165
    %v167 = vmul.f32 %v165, %v166
    %vm168 = vcmp.eq.f32.partialorder %v165, inf
    %v169 = vsel %vm168, %v165, %v167
    %vm170 = vcmp.eq.f32.partialorder %v165, 0.0
    %v171 = vand.u32 %v165, 2147483648
    %v172 = vsel %vm170, %v171, %v169
    %v174 = vrot.slane %v141, 7
    %v177 = vrot.slane %v143, 6
    %v180 = vrot.slane %v145, 5
    %v183 = vrot.slane %v147, 4
    %v186 = vrot.slane %v149, 3
    %v189 = vrot.slane %v151, 2
    %v192 = vrot.slane %v139, 1
    %vm194 = vcmask 1040384
    %v195 = vsel %vm194, %v172, %v174
    %vm196 = vcmask 1041408
    %v197 = vsel %vm196, %v195, %v177
    %vm198 = vcmask 1042432
    %v199 = vsel %vm198, %v197, %v180
    %vm200 = vcmask 1043456
    %v201 = vsel %vm200, %v199, %v183
    %vm202 = vcmask 1044480
    %v203 = vsel %vm202, %v201, %v186
    %vm204 = vcmask 1045504
    %v205 = vsel %vm204, %v203, %v189
    %vm206 = vcmask 1046528
    %v207 = vsel %vm206, %v205, %v192
    %208 = vst [vmem:[#allocation5] sm:$0xff] %v207
    // Predicated region
    $region10: #{tpu_custom_call.1} parent=1 // pred_check
      _
    $region11: #{tpu_custom_call.1} parent=1 // pred_check_branch
      %210 = sbr.rel (0) target = $region13
    $region12: #{tpu_custom_call.1} parent=1 // pred_region
      %s212 = ssub.s32 128, 128
      %213 = vsyncadd [#allocation4], %s212
      %s215 = sshll.u32 [#allocation5], 4
      %s216 = int_to_ptr.vmem [resolvable:$true] %s215
      %218 = dma.vmem_to_hbm [thread:$0]  %s216, 128, %s1, [#allocation4]
    $region13: #{tpu_custom_call.1} parent=1 // pred_fallthru
      _
    // Predicated region
    $region14: #{tpu_custom_call.1} parent=1 // pred_check
      _
    $region15: #{tpu_custom_call.1} parent=1 // pred_check_branch
      %220 = sbr.rel (0) target = $region17
    $region16: #{tpu_custom_call.1} parent=1 // pred_region
      %221 = dma.done [#allocation4], 128
    $region17: #{tpu_custom_call.1} parent=1 // pred_fallthru
      _
    %222 = vsyncpa [#allocation3], 1
    %223 = vsyncpa [#allocation4], 1

</llo_original>
